<compile_context>
chip_gen: v7x
topology: tpu7x:2x2x1
jax: 0.10.0
libtpu: 0.0.40
codegen_flags: <defaults>
</compile_context>

<pallas_src>
import math

import jax
import jax.numpy as jnp
from jax import lax
from jax.experimental import pallas as pl
from jax.experimental.pallas import tpu as pltpu


# ----------------------------------------------------------------------------
# Pallas kernel: fused projection matmul + bias/BatchNorm + GELU
# ----------------------------------------------------------------------------
def _proj_bn_gelu_kernel(p_ref, w_ref, scale_ref, shift_ref, o_ref):
    # (TM, K) @ (K, E) on the MXU, f32 accumulation (bf16 operands).
    y = jnp.dot(p_ref[...], w_ref[...], preferred_element_type=jnp.float32)
    # Fused conv bias + inference BatchNorm:  y * scale + shift.
    y = y * scale_ref[...] + shift_ref[...]
    # GELU (tanh approximation).
    # TODO(synk): PyTorch nn.GELU() default is the exact erf form; erf is not a
    # guaranteed Mosaic lowering, so the tanh approximation is used in-kernel.
    c = 0.7978845608028654  # sqrt(2/pi)
    g = 0.5 * y * (1.0 + jnp.tanh(c * (y + 0.044715 * y * y * y)))
    o_ref[...] = g.astype(o_ref.dtype)


def _gelu_tanh(x):
    c = 0.7978845608028654
    return 0.5 * x * (1.0 + jnp.tanh(c * (x + 0.044715 * x * x * x)))


# ----------------------------------------------------------------------------
# Plain-JAX glue
# ----------------------------------------------------------------------------
def _conv2d_nchw(x, w, b, stride, padding):
    y = lax.conv_general_dilated(
        x, w, window_strides=(stride, stride),
        padding=[(padding, padding), (padding, padding)],
        dimension_numbers=("NCHW", "OIHW", "NCHW"))
    return y + b[None, :, None, None]


def _conv_weight_to_matrix(w_oihw):
    # (OC, IC, KH, KW) -> (KH*KW*IC, OC), flattened in (kh, kw, ic) order, same
    # as the patch columns below.
    oc, ic, kh, kw = w_oihw.shape
    return jnp.transpose(w_oihw, (2, 3, 1, 0)).reshape(kh * kw * ic, oc)


def _deform_im2col(x_nhwc, offset, mask, kernel_size, stride, padding,
                   dilation=1, patch_dtype=jnp.bfloat16):
    """Modulated-deformable im2col (torchvision deform_conv2d v2 sampling).

    offset: (B, 2*K*K, Ho, Wo) with (y, x) interleaved per kernel tap.
    mask:   (B, K*K, Ho, Wo) modulation.
    Returns patches (B*Ho*Wo, K*K*C) flattened as (kh, kw, c), plus Ho, Wo.
    The patch matrix is emitted directly in `patch_dtype` (bf16 for the kernel
    path) so the big transpose/reshape and the HBM round-trip are half-width.
    """
    B, H, W, C = x_nhwc.shape
    KK = kernel_size * kernel_size
    Ho, Wo = offset.shape[2], offset.shape[3]

    off = offset.reshape(B, KK, 2, Ho, Wo)
    off_y, off_x = off[:, :, 0], off[:, :, 1]                      # (B, KK, Ho, Wo)

    k = jnp.arange(kernel_size)
    tap_y = jnp.repeat(k, kernel_size) * dilation                  # (KK,) kh per tap
    tap_x = jnp.tile(k, kernel_size) * dilation                    # (KK,) kw per tap
    base_y = jnp.arange(Ho) * stride - padding
    base_x = jnp.arange(Wo) * stride - padding

    py = (base_y[None, None, :, None] + tap_y[None, :, None, None]).astype(jnp.float32) + off_y
    px = (base_x[None, None, None, :] + tap_x[None, :, None, None]).astype(jnp.float32) + off_x

    y0 = jnp.floor(py)
    x0 = jnp.floor(px)
    ly, lx = py - y0, px - x0
    x_flat = x_nhwc.reshape(B, H * W, C)

    def corner(yc, xc, w):
        valid = (yc >= 0) & (yc <= H - 1) & (xc >= 0) & (xc <= W - 1)
        yi = jnp.clip(yc, 0, H - 1).astype(jnp.int32)
        xi = jnp.clip(xc, 0, W - 1).astype(jnp.int32)
        idx = (yi * W + xi).reshape(B, KK * Ho * Wo, 1)
        # TODO(synk): this data-dependent bilinear gather stays in plain JAX;
        # fusing it into the Pallas kernel would need per-row manual DMA gather
        # (pl.Element / scalar-prefetched indices) and is left as future work.
        g = jnp.take_along_axis(x_flat, idx, axis=1).reshape(B, KK, Ho, Wo, C)
        return g * (w * valid.astype(x_flat.dtype))[..., None]

    val = (corner(y0,     x0,     (1.0 - ly) * (1.0 - lx))
           + corner(y0,     x0 + 1, (1.0 - ly) * lx)
           + corner(y0 + 1, x0,     ly * (1.0 - lx))
           + corner(y0 + 1, x0 + 1, ly * lx))                      # (B, KK, Ho, Wo, C)
    val = (val * mask[..., None]).astype(patch_dtype)              # modulation (DCNv2)

    patches = jnp.transpose(val, (0, 2, 3, 1, 4)).reshape(B * Ho * Wo, KK * C)
    return patches, Ho, Wo


def _deform_patches(x_nchw, params, kernel_size, stride, padding,
                    patch_dtype=jnp.bfloat16):
    B, C, H, W = x_nchw.shape
    off = _conv2d_nchw(x_nchw, params["off_w"], params["off_b"], stride, padding)
    max_off = min(H, W) // 4        # matches the PyTorch module: min(h, w) // 4
    off = jnp.clip(off, -max_off, max_off)
    mod = 2.0 * jax.nn.sigmoid(
        _conv2d_nchw(x_nchw, params["mod_w"], params["mod_b"], stride, padding))
    x_nhwc = jnp.transpose(x_nchw, (0, 2, 3, 1))
    return _deform_im2col(x_nhwc, off, mod, kernel_size, stride, padding,
                          patch_dtype=patch_dtype)


def _round_up(x, m):
    return (x + m - 1) // m * m


def _cdiv(a, b):
    return -(-a // b)


# ----------------------------------------------------------------------------
# Module wrapper
# ----------------------------------------------------------------------------
def deformable_proj_embed(x_nchw, params, *, kernel_size=3, stride=1, padding=1,
                          eps=1e-5, block_m=1024, out_dtype=jnp.bfloat16,
                          output_format="NCHW"):
    """Forward pass of DeformableProjEmbed.

    Returns (B, emb_chans, Ho, Wo) for output_format="NCHW" (module semantics),
    or (B, Ho, Wo, emb_chans) for "NHWC" (skips the final relayout entirely).
    """
    B = x_nchw.shape[0]
    E = params["proj_w"].shape[0]

    # --- glue: offsets, modulation, deformed im2col gather (plain JAX) ---
    # Patch matrix is produced directly in bf16 (halves glue + stream traffic).
    patches, Ho, Wo = _deform_patches(x_nchw, params, kernel_size, stride,
                                      padding, patch_dtype=jnp.bfloat16)
    M, K = patches.shape

    # --- small resident operands for the fused Pallas kernel ---
    wm = _conv_weight_to_matrix(params["proj_w"]).astype(jnp.bfloat16)   # (K, E)
    scale = params["bn_gamma"] / jnp.sqrt(params["bn_var"] + eps)        # (E,)
    shift = (params["proj_b"] - params["bn_mean"]) * scale + params["bn_beta"]
    # TODO(synk): BatchNorm applied in inference mode (running stats); training-
    # mode batch statistics would need a cross-tile reduction pass.

    Ep = _round_up(E, 128)                      # lane-pad E only if needed (no-op at 128)
    if Ep != E:
        wm = jnp.pad(wm, ((0, 0), (0, Ep - E)))
        scale = jnp.pad(scale, (0, Ep - E))
        shift = jnp.pad(shift, (0, Ep - E))
    scale = scale.reshape(1, Ep).astype(jnp.float32)
    shift = shift.reshape(1, Ep).astype(jnp.float32)

    # Token tiling: large tiles amortize the ~0.35 us/step grid overhead, but
    # keep >= 4 grid steps so both v7x TensorCores get >= 2 pipelined steps.
    # NOTE: no contraction-dim padding -- block last-dim == full array dim (K)
    # is legal and avoids a 288->384 (+33%) inflation of the streamed input.
    TM = min(block_m, _round_up(_cdiv(M, 4), 8), _round_up(M, 8))
    Mp = _round_up(M, TM)
    if Mp != M:
        patches = jnp.pad(patches, ((0, Mp - M), (0, 0)))

    out = pl.pallas_call(
        _proj_bn_gelu_kernel,
        out_shape=jax.ShapeDtypeStruct((Mp, Ep), out_dtype),   # bf16 store
        grid=(Mp // TM,),
        in_specs=[
            pl.BlockSpec((TM, K), lambda i: (i, 0)),    # streamed patch tile (bf16)
            pl.BlockSpec((K, Ep), lambda i: (0, 0)),    # resident weight (bf16)
            pl.BlockSpec((1, Ep), lambda i: (0, 0)),    # resident BN scale (f32)
            pl.BlockSpec((1, Ep), lambda i: (0, 0)),    # resident BN shift (f32)
        ],
        out_specs=pl.BlockSpec((TM, Ep), lambda i: (i, 0)),
        compiler_params=pltpu.CompilerParams(
            dimension_semantics=("parallel",)),
    )(patches, wm, scale, shift)

    out = out[:M, :E].reshape(B, Ho, Wo, E)     # NHWC, bf16, padded rows dropped
    if output_format == "NHWC":
        return out
    # NCHW to match the PyTorch module; relayout now moves bf16 (half the bytes).
    return jnp.transpose(out, (0, 3, 1, 2))


# ----------------------------------------------------------------------------
# Deterministic parameter init
# ----------------------------------------------------------------------------
def init_params(key, in_chans, emb_chans, kernel_size=3):
    KK = kernel_size * kernel_size
    k1, k2, k3, k4 = jax.random.split(key, 4)
    w_std = math.sqrt(2.0 / (in_chans * KK))
    # NOTE: the PyTorch module zero-initialises offset_conv / modulator_conv;
    # small non-zero weights are used here so the deformable sampling path is
    # actually exercised (zero offsets degenerate to a plain 3x3 conv).
    return {
        "proj_w": w_std * jax.random.normal(
            k1, (emb_chans, in_chans, kernel_size, kernel_size), jnp.float32),
        "proj_b": 0.02 * jax.random.normal(k2, (emb_chans,), jnp.float32),
        "off_w": 0.05 * jax.random.normal(
            k3, (2 * KK, in_chans, kernel_size, kernel_size), jnp.float32),
        "off_b": jnp.zeros((2 * KK,), jnp.float32),
        "mod_w": 0.05 * jax.random.normal(
            k4, (KK, in_chans, kernel_size, kernel_size), jnp.float32),
        "mod_b": jnp.zeros((KK,), jnp.float32),
        "bn_gamma": jnp.ones((emb_chans,), jnp.float32),
        "bn_beta": jnp.zeros((emb_chans,), jnp.float32),
        "bn_mean": jnp.zeros((emb_chans,), jnp.float32),
        "bn_var": jnp.ones((emb_chans,), jnp.float32),
    }


# ----------------------------------------------------------------------------
# Pure-JAX (f32) reference for the fused (matmul + BN + GELU) part
# ----------------------------------------------------------------------------
def _reference(x_nchw, params, *, kernel_size=3, stride=1, padding=1, eps=1e-5):
    B = x_nchw.shape[0]
    patches, Ho, Wo = _deform_patches(x_nchw, params, kernel_size, stride,
                                      padding, patch_dtype=jnp.float32)
    wm = _conv_weight_to_matrix(params["proj_w"])
    y = patches @ wm + params["proj_b"][None, :]
    scale = params["bn_gamma"] / jnp.sqrt(params["bn_var"] + eps)
    y = (y - params["bn_mean"][None, :]) * scale[None, :] + params["bn_beta"][None, :]
    y = _gelu_tanh(y)
    E = wm.shape[1]
    return jnp.transpose(y.reshape(B, Ho, Wo, E), (0, 3, 1, 2))


if __name__ == "__main__":
    key = jax.random.PRNGKey(0)
    kx, kp = jax.random.split(key)

    B, C_in, H, W = 2, 32, 16, 16
    emb_chans = 128   # lane-dense (128-wide) output, matches module default

    x = jax.random.normal(kx, (B, C_in, H, W), jnp.float32)
    params = init_params(kp, C_in, emb_chans)

    # M = B*H*W = 512 tokens, K = 9*C_in = 288 (unpadded), TM = 128 -> grid (4,)
    out = deformable_proj_embed(x, params)
    out = jax.block_until_ready(out)

    ref = _reference(x, params)
    assert out.shape == (B, emb_chans, H, W), out.shape
    assert out.dtype == jnp.bfloat16, out.dtype
    out_f32 = out.astype(jnp.float32)
    max_err = float(jnp.max(jnp.abs(out_f32 - ref)))
    # bf16 patches + bf16 weights (f32 MXU accumulation) + bf16 output store
    # vs. a full-f32 reference -> loosened tolerance.
    assert jnp.allclose(out_f32, ref, atol=1e-1, rtol=5e-2), max_err

    print("KERNEL_OK")
</pallas_src>

<mosaic_0001>
module attributes {stable_mosaic.version = 11 : i64} {
  func.func @_proj_bn_gelu_kernel(%arg0: i32, %arg1: memref<128x288xbf16, #tpu.memory_space<vmem>>, %arg2: memref<288x128xbf16, #tpu.memory_space<vmem>>, %arg3: memref<1x128xf32, #tpu.memory_space<vmem>>, %arg4: memref<1x128xf32, #tpu.memory_space<vmem>>, %arg5: memref<128x128xbf16, #tpu.memory_space<vmem>>) attributes {dimension_semantics = [#tpu.dimension_semantics<parallel>], iteration_bounds = array<i64: 4>, scalar_prefetch = 0 : i64, scratch_operands = 0 : i64, tpu.core_type = #tpu.core_type<tc>, window_params = [{transform_indices = @transform_0, window_bounds = array<i64: 128, 288>}, {pipeline_mode = #tpu.pipeline_mode<synchronous>, transform_indices = @transform_1, window_bounds = array<i64: 288, 128>}, {pipeline_mode = #tpu.pipeline_mode<synchronous>, transform_indices = @transform_2, window_bounds = array<i64: 1, 128>}, {pipeline_mode = #tpu.pipeline_mode<synchronous>, transform_indices = @transform_3, window_bounds = array<i64: 1, 128>}, {transform_indices = @transform_4, window_bounds = array<i64: 128, 128>}]} {
    %c0 = arith.constant 0 : index
    %c0_0 = arith.constant 0 : index
    %0 = vector.load %arg1[%c0, %c0_0] : memref<128x288xbf16, #tpu.memory_space<vmem>>, vector<128x288xbf16>
    %c0_1 = arith.constant 0 : index
    %c0_2 = arith.constant 0 : index
    %1 = vector.load %arg2[%c0_1, %c0_2] : memref<288x128xbf16, #tpu.memory_space<vmem>>, vector<288x128xbf16>
    %cst = arith.constant dense<0.000000e+00> : vector<128x128xf32>
    %2 = tpu.matmul %0, %1, %cst {dimension_numbers = #tpu.dot_dimension_numbers<[1], [0], [0], [1], [0, 0, 1, 1], [], []>} : vector<128x288xbf16>, vector<288x128xbf16>, vector<128x128xf32> -> vector<128x128xf32>
    %c0_3 = arith.constant 0 : index
    %c0_4 = arith.constant 0 : index
    %3 = vector.load %arg3[%c0_3, %c0_4] : memref<1x128xf32, #tpu.memory_space<vmem>>, vector<1x128xf32>
    %4 = vector.broadcast %3 : vector<1x128xf32> to vector<128x128xf32>
    %5 = arith.mulf %2, %4 : vector<128x128xf32>
    %c0_5 = arith.constant 0 : index
    %c0_6 = arith.constant 0 : index
    %6 = vector.load %arg4[%c0_5, %c0_6] : memref<1x128xf32, #tpu.memory_space<vmem>>, vector<1x128xf32>
    %7 = vector.broadcast %6 : vector<1x128xf32> to vector<128x128xf32>
    %8 = arith.addf %5, %7 : vector<128x128xf32>
    %cst_7 = arith.constant 5.000000e-01 : f32
    %9 = vector.broadcast %cst_7 : f32 to vector<128x128xf32>
    %10 = arith.mulf %9, %8 : vector<128x128xf32>
    %cst_8 = arith.constant 4.471500e-02 : f32
    %11 = vector.broadcast %cst_8 : f32 to vector<128x128xf32>
    %12 = arith.mulf %11, %8 : vector<128x128xf32>
    %13 = arith.mulf %12, %8 : vector<128x128xf32>
    %14 = arith.mulf %13, %8 : vector<128x128xf32>
    %15 = arith.addf %8, %14 : vector<128x128xf32>
    %cst_9 = arith.constant 0.797884583 : f32
    %16 = vector.broadcast %cst_9 : f32 to vector<128x128xf32>
    %17 = arith.mulf %16, %15 : vector<128x128xf32>
    %18 = math.tanh %17 : vector<128x128xf32>
    %cst_10 = arith.constant 1.000000e+00 : f32
    %19 = vector.broadcast %cst_10 : f32 to vector<128x128xf32>
    %20 = arith.addf %19, %18 : vector<128x128xf32>
    %21 = arith.mulf %10, %20 : vector<128x128xf32>
    %22 = arith.truncf %21 : vector<128x128xf32> to vector<128x128xbf16>
    %c0_11 = arith.constant 0 : index
    %c0_12 = arith.constant 0 : index
    %23 = vector.load %arg5[%c0_11, %c0_12] : memref<128x128xbf16, #tpu.memory_space<vmem>>, vector<128x128xbf16>
    tpu.vector_store %arg5[%c0_11, %c0_12], %22 {strides = array<i32>} : memref<128x128xbf16, #tpu.memory_space<vmem>>, vector<128x128xbf16>,
    return
  }
  func.func @transform_0(%arg0: i32) -> (i32, i32) {
    %c0_i32 = arith.constant 0 : i32
    %c0_i32_0 = arith.constant 0 : i32
    return %arg0, %c0_i32 : i32, i32
  }
  func.func @transform_1(%arg0: i32) -> (i32, i32) {
    %c0_i32 = arith.constant 0 : i32
    %c0_i32_0 = arith.constant 0 : i32
    %c0_i32_1 = arith.constant 0 : i32
    return %c0_i32, %c0_i32_0 : i32, i32
  }
  func.func @transform_2(%arg0: i32) -> (i32, i32) {
    %c0_i32 = arith.constant 0 : i32
    %c0_i32_0 = arith.constant 0 : i32
    %c0_i32_1 = arith.constant 0 : i32
    return %c0_i32, %c0_i32_0 : i32, i32
  }
  func.func @transform_3(%arg0: i32) -> (i32, i32) {
    %c0_i32 = arith.constant 0 : i32
    %c0_i32_0 = arith.constant 0 : i32
    %c0_i32_1 = arith.constant 0 : i32
    return %c0_i32, %c0_i32_0 : i32, i32
  }
  func.func @transform_4(%arg0: i32) -> (i32, i32) {
    %c0_i32 = arith.constant 0 : i32
    %c0_i32_0 = arith.constant 0 : i32
    return %arg0, %c0_i32 : i32, i32
  }
}

</mosaic_0001>

<llo_original>
// kernel: tpu_custom_call.1
$region0: #{tpu_custom_call.1}
  #allocation0 [shape = 'u32[]', space=smem, size = 0x4, offset = 0x4, fixed_abs, tag = 'smem constant byte address 0x4 - core index']
  #allocation1 [shape = 'u32[144,128]{1,0:T(1,128)}', space=vmem, size = 0x12000, scoped, tag = 'internal scratch']
  %s0 = inlined_call_operand.vmem [shape: bf16[512,288], index: 0, kind: input, shape index: {}]
  %s1 = inlined_call_operand.vmem [shape: bf16[288,128], index: 1, kind: input, shape index: {}]
  %s2 = inlined_call_operand.vmem [shape: f32[1,128], index: 2, kind: input, shape index: {}]
  %s3 = inlined_call_operand.vmem [shape: f32[1,128], index: 3, kind: input, shape index: {}]
  %s4 = inlined_call_operand.hbm [shape: bf16[512,128], index: 4, kind: output, shape index: {}]
  %s5 = sld [smem:[#allocation0]]
  $region49: #{tpu_custom_call.1} parent=0
    _
  %s7 = ssub.s32 1, %s5
  %s8 = scalar_select 0, %s7, %s5
  $region1: #{tpu_custom_call.1} parent=0
    #allocation2 [shape = 'u8[65536]{0}', space=vmem, size = 0x10000, scoped, tag = 'output window, operand 0']
    #allocation3 [shape = 's32[2]{0}', space=sflag, size = 0x8, scoped, tag = 'scoped memory for tpu_custom_call.1']
    %9 = vsyncpa [#allocation3], 0
    %s10 = scalar_lea.sflag [#allocation3], 1
    %11 = vsyncpa %s10, 0
    loop: start=0, step=1, limit=6
    $region2: #{tpu_custom_call.1} parent=1 // loop_pre_header
      _
    $region3: #{tpu_custom_call.1} parent=1 // loop_header
      %s13 = sphi 0, %s17
      %p14 = scmp.ge.s32.totalorder %s13, 6
      %s23 = sphi 0, %s25
      %s26 = sphi 0, %s23
      %s27 = sphi 0, %s26
      %s43 = sphi 0, %s27
      %s47 = sphi 0, %s47
      %s49 = sphi 0, %s47
      %s50 = sphi 0, %s49
      %s64 = sphi 0, %s50
      %s68 = sphi 0, %s68
      %s70 = sphi 0, %s68
      %s71 = sphi 0, %s70
      %s85 = sphi 0, %s71
      %s89 = sphi 0, %s89
      %s91 = sphi 0, %s89
      %s92 = sphi 0, %s91
      %s106 = sphi 0, %s92
      %s112 = sphi 0, %s114
      %s115 = sphi 0, %s112
      %s116 = sphi 0, %s115
      %s132 = sphi 0, %s116
    $region4: #{tpu_custom_call.1} parent=1 // loop_header_branch
      %16 = sbr.rel (%p14) target = $region8
    $region5: #{tpu_custom_call.1} parent=1 // loop_body
      %s18 = ssub.s32 %s13, 1
      %s19 = ssub.s32 %s13, 2
      %s20 = sadd.s32 %s13, 1
      %s21 = ssub.s32 %s13, %s20
      %p22 = scmp.eq.s32.totalorder %s21, 0
      %s24 = sadd.s32 %s23, 1
      %s25 = scalar_select %p22, %s23, %s24
      %p28 = pneg %p22
      %p29 = scmp.eq.s32.totalorder %s13, 3
      %p30 = por %p28, %p29
      %p31 = scmp.ne.s32.totalorder %s23, %s26
      %p32 = scmp.eq.s32.totalorder %s13, 0
      %p33 = por %p31, %p32
      %p34 = scmp.ne.s32.totalorder %s23, %s26
      %p35 = scmp.eq.s32.totalorder %s18, 3
      %p36 = por %p34, %p35
      %p37 = scmp.ne.s32.totalorder %s26, %s27
      %p38 = scmp.eq.s32.totalorder %s18, 0
      %p39 = por %p37, %p38
      %p40 = scmp.ne.s32.totalorder %s26, %s27
      %p41 = scmp.eq.s32.totalorder %s19, 3
      %p42 = por %p40, %p41
      %p44 = scmp.ne.s32.totalorder %s27, %s43
      %p45 = scmp.eq.s32.totalorder %s19, 0
      %p46 = por %p44, %p45
      %s48 = sadd.s32 %s47, 1
      %p51 = scmp.eq.s32.totalorder %s13, 3
      %p52 = scmp.ne.s32.totalorder %s47, %s49
      %p53 = scmp.eq.s32.totalorder %s13, 0
      %p54 = por %p52, %p53
      %p55 = scmp.ne.s32.totalorder %s47, %s49
      %p56 = scmp.eq.s32.totalorder %s18, 3
      %p57 = por %p55, %p56
      %p58 = scmp.ne.s32.totalorder %s49, %s50
      %p59 = scmp.eq.s32.totalorder %s18, 0
      %p60 = por %p58, %p59
      %p61 = scmp.ne.s32.totalorder %s49, %s50
      %p62 = scmp.eq.s32.totalorder %s19, 3
      %p63 = por %p61, %p62
      %p65 = scmp.ne.s32.totalorder %s50, %s64
      %p66 = scmp.eq.s32.totalorder %s19, 0
      %p67 = por %p65, %p66
      %s69 = sadd.s32 %s68, 1
      %p72 = scmp.eq.s32.totalorder %s13, 3
      %p73 = scmp.ne.s32.totalorder %s68, %s70
      %p74 = scmp.eq.s32.totalorder %s13, 0
      %p75 = por %p73, %p74
      %p76 = scmp.ne.s32.totalorder %s68, %s70
      %p77 = scmp.eq.s32.totalorder %s18, 3
      %p78 = por %p76, %p77
      %p79 = scmp.ne.s32.totalorder %s70, %s71
      %p80 = scmp.eq.s32.totalorder %s18, 0
      %p81 = por %p79, %p80
      %p82 = scmp.ne.s32.totalorder %s70, %s71
      %p83 = scmp.eq.s32.totalorder %s19, 3
      %p84 = por %p82, %p83
      %p86 = scmp.ne.s32.totalorder %s71, %s85
      %p87 = scmp.eq.s32.totalorder %s19, 0
      %p88 = por %p86, %p87
      %s90 = sadd.s32 %s89, 1
      %p93 = scmp.eq.s32.totalorder %s13, 3
      %p94 = scmp.ne.s32.totalorder %s89, %s91
      %p95 = scmp.eq.s32.totalorder %s13, 0
      %p96 = por %p94, %p95
      %p97 = scmp.ne.s32.totalorder %s89, %s91
      %p98 = scmp.eq.s32.totalorder %s18, 3
      %p99 = por %p97, %p98
      %p100 = scmp.ne.s32.totalorder %s91, %s92
      %p101 = scmp.eq.s32.totalorder %s18, 0
      %p102 = por %p100, %p101
      %p103 = scmp.ne.s32.totalorder %s91, %s92
      %p104 = scmp.eq.s32.totalorder %s19, 3
      %p105 = por %p103, %p104
      %p107 = scmp.ne.s32.totalorder %s92, %s106
      %p108 = scmp.eq.s32.totalorder %s19, 0
      %p109 = por %p107, %p108
      %s110 = ssub.s32 %s13, %s20
      %p111 = scmp.eq.s32.totalorder %s110, 0
      %s113 = sadd.s32 %s112, 1
      %s114 = scalar_select %p111, %s112, %s113
      %p117 = pneg %p111
      %p118 = scmp.eq.s32.totalorder %s13, 3
      %p119 = por %p117, %p118
      %p120 = scmp.ne.s32.totalorder %s112, %s115
      %p121 = scmp.eq.s32.totalorder %s13, 0
      %p122 = por %p120, %p121
      %p123 = scmp.ne.s32.totalorder %s112, %s115
      %p124 = scmp.eq.s32.totalorder %s18, 3
      %p125 = por %p123, %p124
      %p126 = scmp.ne.s32.totalorder %s115, %s116
      %p127 = scmp.eq.s32.totalorder %s18, 0
      %p128 = por %p126, %p127
      %p129 = scmp.ne.s32.totalorder %s115, %s116
      %p130 = scmp.eq.s32.totalorder %s19, 3
      %p131 = por %p129, %p130
      %p133 = scmp.ne.s32.totalorder %s116, %s132
      %p134 = scmp.eq.s32.totalorder %s19, 0
      %p135 = por %p133, %p134
      %p136 = scmp.le.s32.totalorder 1, %s13
      %p137 = scmp.lt.s32.totalorder %s13, 5
      %p138 = pnand %p136, %p137
      %p139 = pneg %p138
      // Predicated region
      $region9: #{tpu_custom_call.1} parent=5 // pred_check
        _
      $region10: #{tpu_custom_call.1} parent=5 // pred_check_branch
        %141 = sbr.rel (%p138) target = $region12
      $region11: #{tpu_custom_call.1} parent=5 // pred_region
        %s142 = ssub.s32 %s13, 1
        // Predicated region
        $region13: #{tpu_custom_call.1} parent=11 // pred_check
          %p143 = pneg %p60
        $region14: #{tpu_custom_call.1} parent=11 // pred_check_branch
          %145 = sbr.rel (%p143) target = $region16
        $region15: #{tpu_custom_call.1} parent=11 // pred_region
          _
        $region16: #{tpu_custom_call.1} parent=11 // pred_fallthru
          _
        // Predicated region
        $region17: #{tpu_custom_call.1} parent=11 // pred_check
          %p146 = pneg %p81
        $region18: #{tpu_custom_call.1} parent=11 // pred_check_branch
          %148 = sbr.rel (%p146) target = $region20
        $region19: #{tpu_custom_call.1} parent=11 // pred_region
          _
        $region20: #{tpu_custom_call.1} parent=11 // pred_fallthru
          _
        // Predicated region
        $region21: #{tpu_custom_call.1} parent=11 // pred_check
          %p149 = pneg %p102
        $region22: #{tpu_custom_call.1} parent=11 // pred_check_branch
          %151 = sbr.rel (%p149) target = $region24
        $region23: #{tpu_custom_call.1} parent=11 // pred_region
          _
        $region24: #{tpu_custom_call.1} parent=11 // pred_fallthru
          _
      $region12: #{tpu_custom_call.1} parent=5 // pred_fallthru
        _
      %p152 = scmp.lt.s32.totalorder %s13, 4
      // Predicated region
      $region25: #{tpu_custom_call.1} parent=5 // pred_check
        %p153 = pneg %p152
      $region26: #{tpu_custom_call.1} parent=5 // pred_check_branch
        %155 = sbr.rel (%p153) target = $region28
      $region27: #{tpu_custom_call.1} parent=5 // pred_region
        // Predicated region
        $region29: #{tpu_custom_call.1} parent=27 // pred_check
          %p156 = pneg %p33
        $region30: #{tpu_custom_call.1} parent=27 // pred_check_branch
          %158 = sbr.rel (%p156) target = $region32
        $region31: #{tpu_custom_call.1} parent=27 // pred_region
          %s159 = smul.u32 16, %s13
          %p160 = scmp.lt.s32.totalorder %s159, 63
          %s161 = scalar_select %p160, %s159, 63
          %s162 = smul.addr %s161, 3
          %s163 = smul.addr %s162, 4
          %s164 = scalar_lea.vmem %s0, %s163
          %s165 = smul.u32 16, %s13
        $region32: #{tpu_custom_call.1} parent=27 // pred_fallthru
          _
      $region28: #{tpu_custom_call.1} parent=5 // pred_fallthru
        _
      %p166 = scmp.le.s32.totalorder 1, %s13
      %p167 = scmp.lt.s32.totalorder %s13, 5
      %p168 = pnand %p166, %p167
      %p169 = pneg %p168
      // Predicated region
      $region33: #{tpu_custom_call.1} parent=5 // pred_check
        _
      $region34: #{tpu_custom_call.1} parent=5 // pred_check_branch
        %171 = sbr.rel (%p168) target = $region36
      $region35: #{tpu_custom_call.1} parent=5 // pred_region
        %s172 = ssub.s32 %s13, 1
        %s173 = smul.u32 16, %s18
        %p174 = scmp.lt.s32.totalorder %s173, 63
        %s175 = scalar_select %p174, %s173, 63
        %s176 = smul.addr %s175, 3
        %s177 = smul.addr %s176, 4
        %s178 = scalar_lea.vmem %s0, %s177
        %p179 = pneg %p39
        %p180 = pneg %p36
        %p181 = pneg %p60
        %p182 = pneg %p57
        %p183 = pneg %p81
        %p184 = pneg %p78
        %p185 = pneg %p102
        %p186 = pneg %p99
        %p187 = pneg %p128
        %p188 = pneg %p125
        %s189 = sand.u32 %s115, 1
        %s190 = scalar_lea.sflag [#allocation3], %s189
        %s191 = sand.u32 %s115, 1
        %s192 = smul.addr %s191, 64
        %s193 = scalar_lea.vmem [#allocation2], %s192
        %s194 = smul.u32 16, %s18
        %p195 = scmp.lt.s32.totalorder %s194, 63
        %s196 = scalar_select %p195, %s194, 63
        %s197 = smul.addr %s196, 3
        %s198 = smul.addr %s197, 4
        %s199 = scalar_lea.vmem %s0, %s198
        %s200 = smul.u32 16, %s18
        %s201 = smul.u32 16, %s18
        %v203 = vld [vmem:[%s199] sm:$0xff]
        %v204 = vld [vmem:[%s199 + $0x8] sm:$0xf]
        %v205 = vld [vmem:[%s199 + $0xc] sm:$0xff]
        %v206 = vld [vmem:[%s199 + $0x14] sm:$0xf]
        %v207 = vld [vmem:[%s199 + $0x18] sm:$0xff]
        %v208 = vld [vmem:[%s199 + $0x20] sm:$0xf]
        %v209 = vld [vmem:[%s199 + $0x24] sm:$0xff]
        %v210 = vld [vmem:[%s199 + $0x2c] sm:$0xf]
        %v211 = vld [vmem:[%s199 + $0x30] sm:$0xff]
        %v212 = vld [vmem:[%s199 + $0x38] sm:$0xf]
        %v213 = vld [vmem:[%s199 + $0x3c] sm:$0xff]
        %v214 = vld [vmem:[%s199 + $0x44] sm:$0xf]
        %v215 = vld [vmem:[%s199 + $0x48] sm:$0xff]
        %v216 = vld [vmem:[%s199 + $0x50] sm:$0xf]
        %v217 = vld [vmem:[%s199 + $0x54] sm:$0xff]
        %v218 = vld [vmem:[%s199 + $0x5c] sm:$0xf]
        %v219 = vld [vmem:[%s199 + $0x60] sm:$0xff]
        %v220 = vld [vmem:[%s199 + $0x68] sm:$0xf]
        %v221 = vld [vmem:[%s199 + $0x6c] sm:$0xff]
        %v222 = vld [vmem:[%s199 + $0x74] sm:$0xf]
        %v223 = vld [vmem:[%s199 + $0x78] sm:$0xff]
        %v224 = vld [vmem:[%s199 + $0x80] sm:$0xf]
        %v225 = vld [vmem:[%s199 + $0x84] sm:$0xff]
        %v226 = vld [vmem:[%s199 + $0x8c] sm:$0xf]
        %v227 = vld [vmem:[%s199 + $0x90] sm:$0xff]
        %v228 = vld [vmem:[%s199 + $0x98] sm:$0xf]
        %v229 = vld [vmem:[%s199 + $0x9c] sm:$0xff]
        %v230 = vld [vmem:[%s199 + $0xa4] sm:$0xf]
        %v231 = vld [vmem:[%s199 + $0xa8] sm:$0xff]
        %v232 = vld [vmem:[%s199 + $0xb0] sm:$0xf]
        %v233 = vld [vmem:[%s199 + $0xb4] sm:$0xff]
        %v234 = vld [vmem:[%s199 + $0xbc] sm:$0xf]
        %v235 = vld [vmem:[%s1] sm:$0xf]
        %v236 = vld [vmem:[%s1 + $0x4] sm:$0xf]
        %v237 = vld [vmem:[%s1 + $0x8] sm:$0xf]
        %v238 = vld [vmem:[%s1 + $0xc] sm:$0xf]
        %v239 = vld [vmem:[%s1 + $0x10] sm:$0xf]
        %v240 = vld [vmem:[%s1 + $0x14] sm:$0xf]
        %v241 = vld [vmem:[%s1 + $0x18] sm:$0xf]
        %v242 = vld [vmem:[%s1 + $0x1c] sm:$0xf]
        %v243 = vld [vmem:[%s1 + $0x20] sm:$0xf]
        %v244 = vld [vmem:[%s1 + $0x24] sm:$0xf]
        %v245 = vld [vmem:[%s1 + $0x28] sm:$0xf]
        %v246 = vld [vmem:[%s1 + $0x2c] sm:$0xf]
        %v247 = vld [vmem:[%s1 + $0x30] sm:$0xf]
        %v248 = vld [vmem:[%s1 + $0x34] sm:$0xf]
        %v249 = vld [vmem:[%s1 + $0x38] sm:$0xf]
        %v250 = vld [vmem:[%s1 + $0x3c] sm:$0xf]
        %v251 = vld [vmem:[%s1 + $0x40] sm:$0xf]
        %v252 = vld [vmem:[%s1 + $0x44] sm:$0xf]
        %v253 = vld [vmem:[%s1 + $0x48] sm:$0xf]
        %v254 = vld [vmem:[%s1 + $0x4c] sm:$0xf]
        %v255 = vld [vmem:[%s1 + $0x50] sm:$0xf]
        %v256 = vld [vmem:[%s1 + $0x54] sm:$0xf]
        %v257 = vld [vmem:[%s1 + $0x58] sm:$0xf]
        %v258 = vld [vmem:[%s1 + $0x5c] sm:$0xf]
        %v259 = vld [vmem:[%s1 + $0x60] sm:$0xf]
        %v260 = vld [vmem:[%s1 + $0x64] sm:$0xf]
        %v261 = vld [vmem:[%s1 + $0x68] sm:$0xf]
        %v262 = vld [vmem:[%s1 + $0x6c] sm:$0xf]
        %v263 = vld [vmem:[%s1 + $0x70] sm:$0xf]
        %v264 = vld [vmem:[%s1 + $0x74] sm:$0xf]
        %v265 = vld [vmem:[%s1 + $0x78] sm:$0xf]
        %v266 = vld [vmem:[%s1 + $0x7c] sm:$0xf]
        %v267 = vld [vmem:[%s1 + $0x80] sm:$0xf]
        %v268 = vld [vmem:[%s1 + $0x84] sm:$0xf]
        %v269 = vld [vmem:[%s1 + $0x88] sm:$0xf]
        %v270 = vld [vmem:[%s1 + $0x8c] sm:$0xf]
        %v303 = vunpack.c.l.b16 %v203
        %v304 = vunpack.c.h.b16 %v203
        %v305 = vunpack.c.l.b16 %v204
        %v306 = vunpack.c.l.b16 %v205
        %v307 = vunpack.c.h.b16 %v205
        %v308 = vunpack.c.l.b16 %v206
        %v309 = vunpack.c.l.b16 %v207
        %v310 = vunpack.c.h.b16 %v207
        %v311 = vunpack.c.l.b16 %v208
        %v312 = vunpack.c.l.b16 %v209
        %v313 = vunpack.c.h.b16 %v209
        %v314 = vunpack.c.l.b16 %v210
        %v315 = vunpack.c.l.b16 %v211
        %v316 = vunpack.c.h.b16 %v211
        %v317 = vunpack.c.l.b16 %v212
        %v318 = vunpack.c.l.b16 %v213
        %v319 = vunpack.c.h.b16 %v213
        %v320 = vunpack.c.l.b16 %v214
        %v321 = vunpack.c.l.b16 %v215
        %v322 = vunpack.c.h.b16 %v215
        %v323 = vunpack.c.l.b16 %v216
        %v324 = vunpack.c.l.b16 %v217
        %v325 = vunpack.c.h.b16 %v217
        %v326 = vunpack.c.l.b16 %v218
        %v327 = vunpack.c.l.b16 %v219
        %v328 = vunpack.c.h.b16 %v219
        %v329 = vunpack.c.l.b16 %v220
        %v330 = vunpack.c.l.b16 %v221
        %v331 = vunpack.c.h.b16 %v221
        %v332 = vunpack.c.l.b16 %v222
        %v333 = vunpack.c.l.b16 %v223
        %v334 = vunpack.c.h.b16 %v223
        %v335 = vunpack.c.l.b16 %v224
        %v336 = vunpack.c.l.b16 %v225
        %v337 = vunpack.c.h.b16 %v225
        %v338 = vunpack.c.l.b16 %v226
        %v339 = vunpack.c.l.b16 %v227
        %v340 = vunpack.c.h.b16 %v227
        %v341 = vunpack.c.l.b16 %v228
        %v342 = vunpack.c.l.b16 %v229
        %v343 = vunpack.c.h.b16 %v229
        %v344 = vunpack.c.l.b16 %v230
        %v345 = vunpack.c.l.b16 %v231
        %v346 = vunpack.c.h.b16 %v231
        %v347 = vunpack.c.l.b16 %v232
        %v348 = vunpack.c.l.b16 %v233
        %v349 = vunpack.c.h.b16 %v233
        %v350 = vunpack.c.l.b16 %v234
        %v351 = vpack.c.b16 %v306, %v303
        %v352 = vpack.c.b16 %v307, %v304
        %v353 = vpack.c.b16 %v308, %v305
        %v354 = vpack.c.b16 %v312, %v309
        %v355 = vpack.c.b16 %v313, %v310
        %v356 = vpack.c.b16 %v314, %v311
        %v357 = vpack.c.b16 %v318, %v315
        %v358 = vpack.c.b16 %v319, %v316
        %v359 = vpack.c.b16 %v320, %v317
        %v360 = vpack.c.b16 %v324, %v321
        %v361 = vpack.c.b16 %v325, %v322
        %v362 = vpack.c.b16 %v326, %v323
        %v363 = vpack.c.b16 %v330, %v327
        %v364 = vpack.c.b16 %v331, %v328
        %v365 = vpack.c.b16 %v332, %v329
        %v366 = vpack.c.b16 %v336, %v333
        %v367 = vpack.c.b16 %v337, %v334
        %v368 = vpack.c.b16 %v338, %v335
        %v369 = vpack.c.b16 %v342, %v339
        %v370 = vpack.c.b16 %v343, %v340
        %v371 = vpack.c.b16 %v344, %v341
        %v372 = vpack.c.b16 %v348, %v345
        %v373 = vpack.c.b16 %v349, %v346
        %v374 = vpack.c.b16 %v350, %v347
        %v427 = vunpack.c.l.b16 %v235
        %v428 = vunpack.c.l.b16 %v236
        %v429 = vunpack.c.l.b16 %v237
        %v430 = vunpack.c.l.b16 %v238
        %v431 = vunpack.c.l.b16 %v239
        %v432 = vunpack.c.l.b16 %v240
        %v433 = vunpack.c.l.b16 %v241
        %v434 = vunpack.c.l.b16 %v242
        %v435 = vunpack.c.l.b16 %v243
        %v436 = vunpack.c.l.b16 %v244
        %v437 = vunpack.c.l.b16 %v245
        %v438 = vunpack.c.l.b16 %v246
        %v439 = vunpack.c.l.b16 %v247
        %v440 = vunpack.c.l.b16 %v248
        %v441 = vunpack.c.l.b16 %v249
        %v442 = vunpack.c.l.b16 %v250
        %v443 = vunpack.c.l.b16 %v251
        %v444 = vunpack.c.l.b16 %v252
        %v445 = vunpack.c.l.b16 %v253
        %v446 = vunpack.c.l.b16 %v254
        %v447 = vunpack.c.l.b16 %v255
        %v448 = vunpack.c.l.b16 %v256
        %v449 = vunpack.c.l.b16 %v257
        %v450 = vunpack.c.l.b16 %v258
        %v451 = vunpack.c.l.b16 %v259
        %v452 = vunpack.c.l.b16 %v260
        %v453 = vunpack.c.l.b16 %v261
        %v454 = vunpack.c.l.b16 %v262
        %v455 = vunpack.c.l.b16 %v263
        %v456 = vunpack.c.l.b16 %v264
        %v457 = vunpack.c.l.b16 %v265
        %v458 = vunpack.c.l.b16 %v266
        %v459 = vunpack.c.l.b16 %v267
        %v460 = vunpack.c.l.b16 %v268
        %v461 = vunpack.c.l.b16 %v269
        %v462 = vunpack.c.l.b16 %v270
        %v463 = vpack.c.b16 %v428, %v427
        %v464 = vpack.c.b16 %v430, %v429
        %v465 = vpack.c.b16 %v432, %v431
        %v466 = vpack.c.b16 %v434, %v433
        %v467 = vpack.c.b16 %v436, %v435
        %v468 = vpack.c.b16 %v438, %v437
        %v469 = vpack.c.b16 %v440, %v439
        %v470 = vpack.c.b16 %v442, %v441
        %v471 = vpack.c.b16 %v444, %v443
        %v472 = vpack.c.b16 %v446, %v445
        %v473 = vpack.c.b16 %v448, %v447
        %v474 = vpack.c.b16 %v450, %v449
        %v475 = vpack.c.b16 %v452, %v451
        %v476 = vpack.c.b16 %v454, %v453
        %v477 = vpack.c.b16 %v456, %v455
        %v478 = vpack.c.b16 %v458, %v457
        %v479 = vpack.c.b16 %v460, %v459
        %v480 = vpack.c.b16 %v462, %v461
        %vm499 = vcmask 261120
        %v501 = vsel %vm499, %v353, 0
        %v504 = vsel %vm499, %v356, 0
        %v507 = vsel %vm499, %v359, 0
        %v510 = vsel %vm499, %v362, 0
        %v513 = vsel %vm499, %v365, 0
        %v516 = vsel %vm499, %v368, 0
        %v519 = vsel %vm499, %v371, 0
        %v522 = vsel %vm499, %v374, 0
        %524 = vmatprep.subr.bf16.mxu0 0
        %525 = vmatpush1.bf16.msra.mxu0 %v463
        %526 = vmatprep.subr.bf16.mxu0 0
        %527 = vmatpush1.bf16.msra.mxu0 %v464
        %528 = vmatprep.subr.bf16.mxu0 0
        %529 = vmatpush1.bf16.msra.mxu0 %v465
        %530 = vmatprep.subr.bf16.mxu0 0
        %531 = vmatpush1.bf16.msra.mxu0 %v466
        %532 = vmatprep.subr.bf16.mxu0 0
        %533 = vmatpush1.bf16.msra.mxu0 %v467
        %534 = vmatprep.subr.bf16.mxu0 0
        %535 = vmatpush1.bf16.msra.mxu0 %v468
        %536 = vmatprep.subr.bf16.mxu0 0
        %537 = vmatpush1.bf16.msra.mxu0 %v469
        %538 = vmatprep.subr.bf16.mxu0 0
        %539 = vmatpush1.bf16.msra.mxu0 %v470
        %540 = vmatprep.subr.bf16.mxu0 0
        %541 = vmatpush1.bf16.msra.mxu0 %v471
        %542 = vmatprep.subr.bf16.mxu0 0
        %543 = vmatpush1.bf16.msra.mxu0 %v472
        %544 = vmatprep.subr.bf16.mxu0 0
        %545 = vmatpush1.bf16.msra.mxu0 %v473
        %546 = vmatprep.subr.bf16.mxu0 0
        %547 = vmatpush1.bf16.msra.mxu0 %v474
        %548 = vmatprep.subr.bf16.mxu0 0
        %549 = vmatpush1.bf16.msra.mxu0 %v475
        %550 = vmatprep.subr.bf16.mxu0 0
        %551 = vmatpush1.bf16.msra.mxu0 %v476
        %552 = vmatprep.subr.bf16.mxu0 0
        %553 = vmatpush1.bf16.msra.mxu0 %v477
        %554 = vmatprep.subr.bf16.mxu0 0
        %555 = vmatpush1.bf16.msra.mxu0 %v478
        %556 = vmatprep.mubr.bf16.mxu0 %v352
        %557 = vmatmul.mubr.bf16.gmra.mrb[0].mxu0 %v351
        %v558 = vpop.f32.mrb[0].mxu0
        %v559 = vadd.f32 0.0, %v558
        %v560 = vpop.f32.mrb[0].mxu0
        %v561 = vpop.f32.mrb[0].mxu0
        %v562 = vadd.f32 0.0, %v561
        %v563 = vpop.f32.mrb[0].mxu0
        %564 = vmatprep.mubr.bf16.mxu0 %v355
        %565 = vmatmul.mubr.bf16.gmra.mrb[0].mxu0 %v354
        %v566 = vpop.f32.mrb[0].mxu0
        %v567 = vadd.f32 0.0, %v566
        %v568 = vpop.f32.mrb[0].mxu0
        %v569 = vpop.f32.mrb[0].mxu0
        %v570 = vadd.f32 0.0, %v569
        %v571 = vpop.f32.mrb[0].mxu0
        %572 = vmatprep.mubr.bf16.mxu0 %v358
        %573 = vmatmul.mubr.bf16.gmra.mrb[0].mxu0 %v357
        %v574 = vpop.f32.mrb[0].mxu0
        %v575 = vadd.f32 0.0, %v574
        %v576 = vpop.f32.mrb[0].mxu0
        %v577 = vpop.f32.mrb[0].mxu0
        %v578 = vadd.f32 0.0, %v577
        %v579 = vpop.f32.mrb[0].mxu0
        %580 = vmatprep.mubr.bf16.mxu0 %v361
        %581 = vmatmul.mubr.bf16.gmra.mrb[0].mxu0 %v360
        %v582 = vpop.f32.mrb[0].mxu0
        %v583 = vadd.f32 0.0, %v582
        %v584 = vpop.f32.mrb[0].mxu0
        %v585 = vpop.f32.mrb[0].mxu0
        %v586 = vadd.f32 0.0, %v585
        %v587 = vpop.f32.mrb[0].mxu0
        %588 = vmatprep.mubr.bf16.mxu0 %v364
        %589 = vmatmul.mubr.bf16.gmra.mrb[0].mxu0 %v363
        %v590 = vpop.f32.mrb[0].mxu0
        %v591 = vadd.f32 0.0, %v590
        %v592 = vpop.f32.mrb[0].mxu0
        %v593 = vpop.f32.mrb[0].mxu0
        %v594 = vadd.f32 0.0, %v593
        %v595 = vpop.f32.mrb[0].mxu0
        %596 = vmatprep.mubr.bf16.mxu0 %v367
        %597 = vmatmul.mubr.bf16.gmra.mrb[0].mxu0 %v366
        %v598 = vpop.f32.mrb[0].mxu0
        %v599 = vadd.f32 0.0, %v598
        %v600 = vpop.f32.mrb[0].mxu0
        %v601 = vpop.f32.mrb[0].mxu0
        %v602 = vadd.f32 0.0, %v601
        %v603 = vpop.f32.mrb[0].mxu0
        %604 = vmatprep.mubr.bf16.mxu0 %v370
        %605 = vmatmul.mubr.bf16.gmra.mrb[0].mxu0 %v369
        %v606 = vpop.f32.mrb[0].mxu0
        %v607 = vadd.f32 0.0, %v606
        %v608 = vpop.f32.mrb[0].mxu0
        %v609 = vpop.f32.mrb[0].mxu0
        %v610 = vadd.f32 0.0, %v609
        %v611 = vpop.f32.mrb[0].mxu0
        %612 = vmatprep.mubr.bf16.mxu0 %v373
        %613 = vmatmul.mubr.bf16.gmra.mrb[0].mxu0 %v372
        %v614 = vpop.f32.mrb[0].mxu0
        %v615 = vadd.f32 0.0, %v614
        %v616 = vpop.f32.mrb[0].mxu0
        %v617 = vpop.f32.mrb[0].mxu0
        %v618 = vadd.f32 0.0, %v617
        %v619 = vpop.f32.mrb[0].mxu0
        %620 = vdwg.mxu0
        %621 = vmatprep.subr.bf16.mxu0 0
        %622 = vmatpush1.bf16.msra.mxu0 %v479
        %623 = vmatprep.subr.bf16.mxu0 0
        %624 = vmatpush1.bf16.msra.mxu0 %v480
        %625 = vmatprep.subr.bf16.mxu0 0
        %626 = vmatpush1.bf16.msra.mxu0 0
        %627 = vmatprep.subr.bf16.mxu0 0
        %628 = vmatpush1.bf16.msra.mxu0 0
        %629 = vmatprep.subr.bf16.mxu0 0
        %630 = vmatpush1.bf16.msra.mxu0 0
        %631 = vmatprep.subr.bf16.mxu0 0
        %632 = vmatpush1.bf16.msra.mxu0 0
        %633 = vmatprep.subr.bf16.mxu0 0
        %634 = vmatpush1.bf16.msra.mxu0 0
        %635 = vmatprep.subr.bf16.mxu0 0
        %636 = vmatpush1.bf16.msra.mxu0 0
        %637 = vmatprep.subr.bf16.mxu0 0
        %638 = vmatpush1.bf16.msra.mxu0 0
        %639 = vmatprep.subr.bf16.mxu0 0
        %640 = vmatpush1.bf16.msra.mxu0 0
        %641 = vmatprep.subr.bf16.mxu0 0
        %642 = vmatpush1.bf16.msra.mxu0 0
        %643 = vmatprep.subr.bf16.mxu0 0
        %644 = vmatpush1.bf16.msra.mxu0 0
        %645 = vmatprep.subr.bf16.mxu0 0
        %646 = vmatpush1.bf16.msra.mxu0 0
        %647 = vmatprep.subr.bf16.mxu0 0
        %648 = vmatpush1.bf16.msra.mxu0 0
        %649 = vmatprep.subr.bf16.mxu0 0
        %650 = vmatpush1.bf16.msra.mxu0 0
        %651 = vmatprep.subr.bf16.mxu0 0
        %652 = vmatpush1.bf16.msra.mxu0 0
        %653 = vmatprep.mubr.bf16.mxu0 0
        %654 = vmatmul.mubr.bf16.gmra.mrb[0].mxu0 %v501
        %v655 = vpop.f32.mrb[0].mxu0
        %v656 = vadd.f32 %v559, %v655
        %v657 = vpop.f32.mrb[0].mxu0
        %v658 = vpop.f32.mrb[0].mxu0
        %v659 = vadd.f32 %v562, %v658
        %v660 = vpop.f32.mrb[0].mxu0
        %661 = vmatprep.mubr.bf16.mxu0 0
        %662 = vmatmul.mubr.bf16.gmra.mrb[0].mxu0 %v504
        %v663 = vpop.f32.mrb[0].mxu0
        %v664 = vadd.f32 %v567, %v663
        %v665 = vpop.f32.mrb[0].mxu0
        %v666 = vpop.f32.mrb[0].mxu0
        %v667 = vadd.f32 %v570, %v666
        %v668 = vpop.f32.mrb[0].mxu0
        %669 = vmatprep.mubr.bf16.mxu0 0
        %670 = vmatmul.mubr.bf16.gmra.mrb[0].mxu0 %v507
        %v671 = vpop.f32.mrb[0].mxu0
        %v672 = vadd.f32 %v575, %v671
        %v673 = vpop.f32.mrb[0].mxu0
        %v674 = vpop.f32.mrb[0].mxu0
        %v675 = vadd.f32 %v578, %v674
        %v676 = vpop.f32.mrb[0].mxu0
        %677 = vmatprep.mubr.bf16.mxu0 0
        %678 = vmatmul.mubr.bf16.gmra.mrb[0].mxu0 %v510
        %v679 = vpop.f32.mrb[0].mxu0
        %v680 = vadd.f32 %v583, %v679
        %v681 = vpop.f32.mrb[0].mxu0
        %v682 = vpop.f32.mrb[0].mxu0
        %v683 = vadd.f32 %v586, %v682
        %v684 = vpop.f32.mrb[0].mxu0
        %685 = vmatprep.mubr.bf16.mxu0 0
        %686 = vmatmul.mubr.bf16.gmra.mrb[0].mxu0 %v513
        %v687 = vpop.f32.mrb[0].mxu0
        %v688 = vadd.f32 %v591, %v687
        %v689 = vpop.f32.mrb[0].mxu0
        %v690 = vpop.f32.mrb[0].mxu0
        %v691 = vadd.f32 %v594, %v690
        %v692 = vpop.f32.mrb[0].mxu0
        %693 = vmatprep.mubr.bf16.mxu0 0
        %694 = vmatmul.mubr.bf16.gmra.mrb[0].mxu0 %v516
        %v695 = vpop.f32.mrb[0].mxu0
        %v696 = vadd.f32 %v599, %v695
        %v697 = vpop.f32.mrb[0].mxu0
        %v698 = vpop.f32.mrb[0].mxu0
        %v699 = vadd.f32 %v602, %v698
        %v700 = vpop.f32.mrb[0].mxu0
        %701 = vmatprep.mubr.bf16.mxu0 0
        %702 = vmatmul.mubr.bf16.gmra.mrb[0].mxu0 %v519
        %v703 = vpop.f32.mrb[0].mxu0
        %v704 = vadd.f32 %v607, %v703
        %v705 = vpop.f32.mrb[0].mxu0
        %v706 = vpop.f32.mrb[0].mxu0
        %v707 = vadd.f32 %v610, %v706
        %v708 = vpop.f32.mrb[0].mxu0
        %709 = vmatprep.mubr.bf16.mxu0 0
        %710 = vmatmul.mubr.bf16.gmra.mrb[0].mxu0 %v522
        %v711 = vpop.f32.mrb[0].mxu0
        %v712 = vadd.f32 %v615, %v711
        %v713 = vpop.f32.mrb[0].mxu0
        %v714 = vpop.f32.mrb[0].mxu0
        %v715 = vadd.f32 %v618, %v714
        %v716 = vpop.f32.mrb[0].mxu0
        %717 = vdwg.mxu0
        %v718 = vld [vmem:[%s2] sm:$0x1]
        %v720 = vlaneseq
        %v721 = vshrl.u32 %v720, 7
        %v722 = vsub.s32 0, %v721
        %v723 = vrot.slane %v718, %v722
        %v725 = vmul.f32 %v656, %v723
        %v726 = vmul.f32 %v659, %v723
        %v727 = vmul.f32 %v664, %v723
        %v728 = vmul.f32 %v667, %v723
        %v729 = vmul.f32 %v672, %v723
        %v730 = vmul.f32 %v675, %v723
        %v731 = vmul.f32 %v680, %v723
        %v732 = vmul.f32 %v683, %v723
        %v733 = vmul.f32 %v688, %v723
        %v734 = vmul.f32 %v691, %v723
        %v735 = vmul.f32 %v696, %v723
        %v736 = vmul.f32 %v699, %v723
        %v737 = vmul.f32 %v704, %v723
        %v738 = vmul.f32 %v707, %v723
        %v739 = vmul.f32 %v712, %v723
        %v740 = vmul.f32 %v715, %v723
        %v741 = vld [vmem:[%s3] sm:$0x1]
        %v743 = vlaneseq
        %v744 = vshrl.u32 %v743, 7
        %v745 = vsub.s32 0, %v744
        %v746 = vrot.slane %v741, %v745
        %v748 = vadd.f32 %v725, %v746
        %v749 = vadd.f32 %v726, %v746
        %v750 = vadd.f32 %v727, %v746
        %v751 = vadd.f32 %v728, %v746
        %v752 = vadd.f32 %v729, %v746
        %v753 = vadd.f32 %v730, %v746
        %v754 = vadd.f32 %v731, %v746
        %v755 = vadd.f32 %v732, %v746
        %v756 = vadd.f32 %v733, %v746
        %v757 = vadd.f32 %v734, %v746
        %v758 = vadd.f32 %v735, %v746
        %v759 = vadd.f32 %v736, %v746
        %v760 = vadd.f32 %v737, %v746
        %v761 = vadd.f32 %v738, %v746
        %v762 = vadd.f32 %v739, %v746
        %v763 = vadd.f32 %v740, %v746
        %v764 = vmul.f32 %v748, 0.5
        %v765 = vmul.f32 %v749, 0.5
        %v766 = vmul.f32 %v750, 0.5
        %v767 = vmul.f32 %v751, 0.5
        %v768 = vmul.f32 %v752, 0.5
        %v769 = vmul.f32 %v753, 0.5
        %v770 = vmul.f32 %v754, 0.5
        %v771 = vmul.f32 %v755, 0.5
        %v772 = vmul.f32 %v756, 0.5
        %v773 = vmul.f32 %v757, 0.5
        %v774 = vmul.f32 %v758, 0.5
        %v775 = vmul.f32 %v759, 0.5
        %v776 = vmul.f32 %v760, 0.5
        %v777 = vmul.f32 %v761, 0.5
        %v778 = vmul.f32 %v762, 0.5
        %v779 = vmul.f32 %v763, 0.5
        %v780 = vmul.f32 %v748, 0.044715
        %v781 = vmul.f32 %v749, 0.044715
        %v782 = vmul.f32 %v750, 0.044715
        %v783 = vmul.f32 %v751, 0.044715
        %v784 = vmul.f32 %v752, 0.044715
        %v785 = vmul.f32 %v753, 0.044715
        %v786 = vmul.f32 %v754, 0.044715
        %v787 = vmul.f32 %v755, 0.044715
        %v788 = vmul.f32 %v756, 0.044715
        %v789 = vmul.f32 %v757, 0.044715
        %v790 = vmul.f32 %v758, 0.044715
        %v791 = vmul.f32 %v759, 0.044715
        %v792 = vmul.f32 %v760, 0.044715
        %v793 = vmul.f32 %v761, 0.044715
        %v794 = vmul.f32 %v762, 0.044715
        %v795 = vmul.f32 %v763, 0.044715
        %v796 = vmul.f32 %v780, %v748
        %v797 = vmul.f32 %v781, %v749
        %v798 = vmul.f32 %v782, %v750
        %v799 = vmul.f32 %v783, %v751
        %v800 = vmul.f32 %v784, %v752
        %v801 = vmul.f32 %v785, %v753
        %v802 = vmul.f32 %v786, %v754
        %v803 = vmul.f32 %v787, %v755
        %v804 = vmul.f32 %v788, %v756
        %v805 = vmul.f32 %v789, %v757
        %v806 = vmul.f32 %v790, %v758
        %v807 = vmul.f32 %v791, %v759
        %v808 = vmul.f32 %v792, %v760
        %v809 = vmul.f32 %v793, %v761
        %v810 = vmul.f32 %v794, %v762
        %v811 = vmul.f32 %v795, %v763
        %v812 = vmul.f32 %v796, %v748
        %v813 = vmul.f32 %v797, %v749
        %v814 = vmul.f32 %v798, %v750
        %v815 = vmul.f32 %v799, %v751
        %v816 = vmul.f32 %v800, %v752
        %v817 = vmul.f32 %v801, %v753
        %v818 = vmul.f32 %v802, %v754
        %v819 = vmul.f32 %v803, %v755
        %v820 = vmul.f32 %v804, %v756
        %v821 = vmul.f32 %v805, %v757
        %v822 = vmul.f32 %v806, %v758
        %v823 = vmul.f32 %v807, %v759
        %v824 = vmul.f32 %v808, %v760
        %v825 = vmul.f32 %v809, %v761
        %v826 = vmul.f32 %v810, %v762
        %v827 = vmul.f32 %v811, %v763
        %v828 = vadd.f32 %v748, %v812
        %v829 = vadd.f32 %v749, %v813
        %v830 = vadd.f32 %v750, %v814
        %v831 = vadd.f32 %v751, %v815
        %v832 = vadd.f32 %v752, %v816
        %v833 = vadd.f32 %v753, %v817
        %v834 = vadd.f32 %v754, %v818
        %v835 = vadd.f32 %v755, %v819
        %v836 = vadd.f32 %v756, %v820
        %v837 = vadd.f32 %v757, %v821
        %v838 = vadd.f32 %v758, %v822
        %v839 = vadd.f32 %v759, %v823
        %v840 = vadd.f32 %v760, %v824
        %v841 = vadd.f32 %v761, %v825
        %v842 = vadd.f32 %v762, %v826
        %v843 = vadd.f32 %v763, %v827
        %v844 = vmul.f32 %v828, 0.7978846
        %v845 = vmul.f32 %v829, 0.7978846
        %v846 = vmul.f32 %v830, 0.7978846
        %v847 = vmul.f32 %v831, 0.7978846
        %v848 = vmul.f32 %v832, 0.7978846
        %v849 = vmul.f32 %v833, 0.7978846
        %v850 = vmul.f32 %v834, 0.7978846
        %v851 = vmul.f32 %v835, 0.7978846
        %v852 = vmul.f32 %v836, 0.7978846
        %v853 = vmul.f32 %v837, 0.7978846
        %v854 = vmul.f32 %v838, 0.7978846
        %v855 = vmul.f32 %v839, 0.7978846
        %v856 = vmul.f32 %v840, 0.7978846
        %v857 = vmul.f32 %v841, 0.7978846
        %v858 = vmul.f32 %v842, 0.7978846
        %v859 = vmul.f32 %v843, 0.7978846
        %v860 = vtanh.pop %v844
        %v861 = vtanh.pop %v845
        %v862 = vtanh.pop %v846
        %v863 = vtanh.pop %v847
        %v864 = vtanh.pop %v848
        %v865 = vtanh.pop %v849
        %v866 = vtanh.pop %v850
        %v867 = vtanh.pop %v851
        %v868 = vtanh.pop %v852
        %v869 = vtanh.pop %v853
        %v870 = vtanh.pop %v854
        %v871 = vtanh.pop %v855
        %v872 = vtanh.pop %v856
        %v873 = vtanh.pop %v857
        %v874 = vtanh.pop %v858
        %v875 = vtanh.pop %v859
        %v876 = vadd.f32 %v860, 1.0
        %v877 = vadd.f32 %v861, 1.0
        %v878 = vadd.f32 %v862, 1.0
        %v879 = vadd.f32 %v863, 1.0
        %v880 = vadd.f32 %v864, 1.0
        %v881 = vadd.f32 %v865, 1.0
        %v882 = vadd.f32 %v866, 1.0
        %v883 = vadd.f32 %v867, 1.0
        %v884 = vadd.f32 %v868, 1.0
        %v885 = vadd.f32 %v869, 1.0
        %v886 = vadd.f32 %v870, 1.0
        %v887 = vadd.f32 %v871, 1.0
        %v888 = vadd.f32 %v872, 1.0
        %v889 = vadd.f32 %v873, 1.0
        %v890 = vadd.f32 %v874, 1.0
        %v891 = vadd.f32 %v875, 1.0
        %v892 = vmul.f32 %v764, %v876
        %v893 = vmul.f32 %v765, %v877
        %v894 = vmul.f32 %v766, %v878
        %v895 = vmul.f32 %v767, %v879
        %v896 = vmul.f32 %v768, %v880
        %v897 = vmul.f32 %v769, %v881
        %v898 = vmul.f32 %v770, %v882
        %v899 = vmul.f32 %v771, %v883
        %v900 = vmul.f32 %v772, %v884
        %v901 = vmul.f32 %v773, %v885
        %v902 = vmul.f32 %v774, %v886
        %v903 = vmul.f32 %v775, %v887
        %v904 = vmul.f32 %v776, %v888
        %v905 = vmul.f32 %v777, %v889
        %v906 = vmul.f32 %v778, %v890
        %v907 = vmul.f32 %v779, %v891
        %v908 = vpack.c.bf16 %v893, %v892
        %v909 = vpack.c.bf16 %v895, %v894
        %v910 = vpack.c.bf16 %v897, %v896
        %v911 = vpack.c.bf16 %v899, %v898
        %v912 = vpack.c.bf16 %v901, %v900
        %v913 = vpack.c.bf16 %v903, %v902
        %v914 = vpack.c.bf16 %v905, %v904
        %v915 = vpack.c.bf16 %v907, %v906
        %v924 = vunpack.c.l.b16 %v908
        %v925 = vunpack.c.h.b16 %v908
        %v926 = vunpack.c.l.b16 %v909
        %v927 = vunpack.c.h.b16 %v909
        %v928 = vunpack.c.l.b16 %v910
        %v929 = vunpack.c.h.b16 %v910
        %v930 = vunpack.c.l.b16 %v911
        %v931 = vunpack.c.h.b16 %v911
        %v932 = vunpack.c.l.b16 %v912
        %v933 = vunpack.c.h.b16 %v912
        %v934 = vunpack.c.l.b16 %v913
        %v935 = vunpack.c.h.b16 %v913
        %v936 = vunpack.c.l.b16 %v914
        %v937 = vunpack.c.h.b16 %v914
        %v938 = vunpack.c.l.b16 %v915
        %v939 = vunpack.c.h.b16 %v915
        %v940 = vpack.c.b16 %v924, %v924
        %v941 = vpack.c.b16 %v925, %v925
        %v942 = vpack.c.b16 %v926, %v926
        %v943 = vpack.c.b16 %v927, %v927
        %v944 = vpack.c.b16 %v928, %v928
        %v945 = vpack.c.b16 %v929, %v929
        %v946 = vpack.c.b16 %v930, %v930
        %v947 = vpack.c.b16 %v931, %v931
        %v948 = vpack.c.b16 %v932, %v932
        %v949 = vpack.c.b16 %v933, %v933
        %v950 = vpack.c.b16 %v934, %v934
        %v951 = vpack.c.b16 %v935, %v935
        %v952 = vpack.c.b16 %v936, %v936
        %v953 = vpack.c.b16 %v937, %v937
        %v954 = vpack.c.b16 %v938, %v938
        %v955 = vpack.c.b16 %v939, %v939
        %972 = vst [vmem:[%s193] sm:$0xf] %v940
        %973 = vst [vmem:[%s193 + $0x4] sm:$0xf] %v941
        %974 = vst [vmem:[%s193 + $0x8] sm:$0xf] %v942
        %975 = vst [vmem:[%s193 + $0xc] sm:$0xf] %v943
        %976 = vst [vmem:[%s193 + $0x10] sm:$0xf] %v944
        %977 = vst [vmem:[%s193 + $0x14] sm:$0xf] %v945
        %978 = vst [vmem:[%s193 + $0x18] sm:$0xf] %v946
        %979 = vst [vmem:[%s193 + $0x1c] sm:$0xf] %v947
        %980 = vst [vmem:[%s193 + $0x20] sm:$0xf] %v948
        %981 = vst [vmem:[%s193 + $0x24] sm:$0xf] %v949
        %982 = vst [vmem:[%s193 + $0x28] sm:$0xf] %v950
        %983 = vst [vmem:[%s193 + $0x2c] sm:$0xf] %v951
        %984 = vst [vmem:[%s193 + $0x30] sm:$0xf] %v952
        %985 = vst [vmem:[%s193 + $0x34] sm:$0xf] %v953
        %986 = vst [vmem:[%s193 + $0x38] sm:$0xf] %v954
        %987 = vst [vmem:[%s193 + $0x3c] sm:$0xf] %v955
        %s988 = sand.u32 %s115, 1
        %s989 = scalar_lea.sflag [#allocation3], %s988
        %s990 = sand.u32 %s115, 1
        %s991 = smul.addr %s990, 64
        %s992 = scalar_lea.vmem [#allocation2], %s991
        // Predicated region
        $region37: #{tpu_custom_call.1} parent=35 // pred_check
          %p993 = pneg %p125
        $region38: #{tpu_custom_call.1} parent=35 // pred_check_branch
          %995 = sbr.rel (%p993) target = $region40
        $region39: #{tpu_custom_call.1} parent=35 // pred_region
          %s996 = smul.u32 16, %s18
          %s998 = ssub.s32 1024, 1024
          %999 = vsyncadd %s989, %s998
          %s1000 = smul.addr %s996, 64
          %s1001 = scalar_lea.hbm %s4, %s1000
          %s1002 = sshll.u32 %s992, 4
          %s1003 = int_to_ptr.vmem [resolvable:$true] %s1002
          %1008 = dma.vmem_to_hbm [thread:$0]  %s1003, 1024, %s1001, %s989, 64, 64, 4
        $region40: #{tpu_custom_call.1} parent=35 // pred_fallthru
          _
      $region36: #{tpu_custom_call.1} parent=5 // pred_fallthru
        _
      %p1009 = scmp.le.s32.totalorder 2, %s13
      // Predicated region
      $region41: #{tpu_custom_call.1} parent=5 // pred_check
        %p1010 = pneg %p1009
      $region42: #{tpu_custom_call.1} parent=5 // pred_check_branch
        %1012 = sbr.rel (%p1010) target = $region44
      $region43: #{tpu_custom_call.1} parent=5 // pred_region
        %s1013 = ssub.s32 %s13, 2
        // Predicated region
        $region45: #{tpu_custom_call.1} parent=43 // pred_check
          %p1014 = pneg %p131
        $region46: #{tpu_custom_call.1} parent=43 // pred_check_branch
          %1016 = sbr.rel (%p1014) target = $region48
        $region47: #{tpu_custom_call.1} parent=43 // pred_region
          %s1017 = sand.u32 %s116, 1
          %s1018 = scalar_lea.sflag [#allocation3], %s1017
          %s1019 = sand.u32 %s116, 1
          %s1020 = smul.addr %s1019, 64
          %s1021 = scalar_lea.vmem [#allocation2], %s1020
          %1022 = dma.done %s1018, 1024
        $region48: #{tpu_custom_call.1} parent=43 // pred_fallthru
          _
      $region44: #{tpu_custom_call.1} parent=5 // pred_fallthru
        _
    $region6: #{tpu_custom_call.1} parent=1 // loop_footer
      %s17 = sadd.s32 1, %s13
    $region7: #{tpu_custom_call.1} parent=1 // loop_footer_branch
      %12 = sbr.rel target = $region3
    $region8: #{tpu_custom_call.1} parent=1 // loop_exit
      _
    %1023 = vsyncpa [#allocation3], 1
    %s1024 = scalar_lea.sflag [#allocation3], 1
    %1025 = vsyncpa %s1024, 1

</llo_original>
